<compile_context>
chip_gen: v7x
topology: tpu7x:2x2x1
jax: 0.10.0
libtpu: 0.0.40
codegen_flags: <defaults>
</compile_context>

<pallas_src>
import math

import jax
import jax.numpy as jnp
from jax.experimental import pallas as pl
from jax.experimental.pallas import tpu as pltpu

FREQ_EMBED_DIM = 256              # matches nn.Module default
HALF_DIM = FREQ_EMBED_DIM // 2    # 128 -> exactly one lane-width
DIM = 128                         # output hidden dim (lane-aligned)
SCALE = 1000.0                    # forward() default `scale`
MAX_TILE_B = 2048                 # EUP/overhead bound, so go big; ~12 MiB VMEM worst case


def _round_up(x, m):
    return ((x + m - 1) // m) * m


def _choose_tile_b(B):
    # Target ~2 grid steps (occupies both TCs on v7x via "parallel" semantics),
    # capped at MAX_TILE_B, floored at 8 rows (sublane granularity).
    half = _round_up(pl.cdiv(max(B, 1), 2), 8)
    return max(8, min(MAX_TILE_B, half))


def timestep_embedding_kernel(freqs_ref, phase_ref, t_ref, w1_ref, b1_ref,
                              w2_ref, b2_ref, out_ref):
    # (tile_b, 1) * (1, 256) + (1, 256) -> (tile_b, 256).
    # freqs_ref already carries SCALE; phase = [0 | pi/2] turns the cos half
    # into sin, so a single sin() produces the concat([sin, cos]) block.
    sc = jnp.sin(t_ref[...] * freqs_ref[...] + phase_ref[...])

    # Single K=256 first-layer matmul (fills the 256-wide MXU on v6e/v7x).
    h = jnp.dot(sc, w1_ref[...], preferred_element_type=jnp.float32) + b1_ref[...]
    h = h * jax.nn.sigmoid(h)  # SiLU

    # Second linear (dim -> dim).
    out = jnp.dot(h, w2_ref[...], preferred_element_type=jnp.float32) + b2_ref[...]
    out_ref[...] = out.astype(out_ref.dtype)


def timestep_embedding(timestep, w1, b1, w2, b2):
    """timestep: [B] float. Linear weights stored as [in, out]. Returns [B, DIM] f32."""
    B = timestep.shape[0]

    tile_b = _choose_tile_b(B)
    Bp = _round_up(B, tile_b)

    t2d = timestep.reshape(B, 1).astype(jnp.float32)
    if Bp != B:
        t2d = jnp.pad(t2d, ((0, Bp - B), (0, 0)))

    # Precompute sinusoid frequencies once (SCALE folded in), duplicated for the
    # cos half, plus the pi/2 phase that converts the second half's sin -> cos.
    emb = math.log(10000.0) / (HALF_DIM - 1)
    freqs = SCALE * jnp.exp(jnp.arange(HALF_DIM, dtype=jnp.float32) * -emb)
    freqs_cat = jnp.concatenate([freqs, freqs]).reshape(1, FREQ_EMBED_DIM)
    phase = jnp.concatenate([
        jnp.zeros((HALF_DIM,), jnp.float32),
        jnp.full((HALF_DIM,), jnp.float32(math.pi / 2)),
    ]).reshape(1, FREQ_EMBED_DIM)

    w1 = w1.astype(jnp.float32)                       # (256, DIM) — used whole
    b1_2d = b1.reshape(1, DIM).astype(jnp.float32)
    w2 = w2.astype(jnp.float32)                       # (DIM, DIM)
    b2_2d = b2.reshape(1, DIM).astype(jnp.float32)

    grid = (Bp // tile_b,)
    const = lambda i: (0, 0)        # resident operands: block index never changes

    cost = pl.CostEstimate(
        flops=2 * Bp * (FREQ_EMBED_DIM * DIM + DIM * DIM),
        transcendentals=Bp * (FREQ_EMBED_DIM + DIM),   # sin(256) + sigmoid(128) per row
        bytes_accessed=4 * (freqs_cat.size + phase.size + w1.size + b1.size
                            + w2.size + b2.size + Bp * (1 + DIM)),
    )

    out = pl.pallas_call(
        timestep_embedding_kernel,
        out_shape=jax.ShapeDtypeStruct((Bp, DIM), jnp.float32),
        grid_spec=pltpu.PrefetchScalarGridSpec(
            num_scalar_prefetch=0,
            grid=grid,
            in_specs=[
                pl.BlockSpec((1, FREQ_EMBED_DIM), const),      # freqs_cat (resident)
                pl.BlockSpec((1, FREQ_EMBED_DIM), const),      # phase     (resident)
                pl.BlockSpec((tile_b, 1), lambda i: (i, 0)),   # t         (pipelined)
                pl.BlockSpec((FREQ_EMBED_DIM, DIM), const),    # w1        (resident)
                pl.BlockSpec((1, DIM), const),                 # b1        (resident)
                pl.BlockSpec((DIM, DIM), const),               # w2        (resident)
                pl.BlockSpec((1, DIM), const),                 # b2        (resident)
            ],
            out_specs=pl.BlockSpec((tile_b, DIM), lambda i: (i, 0)),
        ),
        compiler_params=pltpu.CompilerParams(
            dimension_semantics=("parallel",),
            vmem_limit_bytes=32 * 1024 * 1024,   # raises v5e's 16 MiB default; no-op on v6e/v7x
        ),
        cost_estimate=cost,
    )(freqs_cat, phase, t2d, w1, b1_2d, w2, b2_2d)

    return out[:B]


def reference(timestep, w1, b1, w2, b2):
    """Pure-JAX reference matching the PyTorch module semantics."""
    emb = math.log(10000.0) / (HALF_DIM - 1)
    freqs = jnp.exp(jnp.arange(HALF_DIM, dtype=jnp.float32) * -emb)
    args = SCALE * timestep[:, None] * freqs[None, :]
    hid = jnp.concatenate([jnp.sin(args), jnp.cos(args)], axis=-1)
    h = hid @ w1 + b1
    h = h * jax.nn.sigmoid(h)
    return h @ w2 + b2


if __name__ == "__main__":
    key = jax.random.PRNGKey(0)
    k_t, k_w1, k_b1, k_w2, k_b2 = jax.random.split(key, 5)

    B = 8
    timestep = jax.random.uniform(k_t, (B,), dtype=jnp.float32)  # diffusion times in [0,1)

    # Deterministic synthetic parameters (Linear weights stored as [in, out]).
    w1 = jax.random.normal(k_w1, (FREQ_EMBED_DIM, DIM), dtype=jnp.float32) * 0.02
    b1 = jax.random.normal(k_b1, (DIM,), dtype=jnp.float32) * 0.02
    w2 = jax.random.normal(k_w2, (DIM, DIM), dtype=jnp.float32) * 0.02
    b2 = jax.random.normal(k_b2, (DIM,), dtype=jnp.float32) * 0.02

    out = timestep_embedding(timestep, w1, b1, w2, b2)
    out = jax.block_until_ready(out)

    ref = reference(timestep, w1, b1, w2, b2)
    assert out.shape == (B, DIM)
    assert jnp.allclose(out, ref, atol=1e-4, rtol=1e-4)

    # Batch that is not a multiple of the tile (padding path, grid=2).
    B2 = 37
    t2 = jax.random.uniform(jax.random.PRNGKey(1), (B2,), dtype=jnp.float32)
    out2 = jax.block_until_ready(timestep_embedding(t2, w1, b1, w2, b2))
    ref2 = reference(t2, w1, b1, w2, b2)
    assert out2.shape == (B2, DIM)
    assert jnp.allclose(out2, ref2, atol=1e-4, rtol=1e-4)

    # Larger batch exercising the 2-step grid intended for megacore sharding.
    B3 = 300
    t3 = jax.random.uniform(jax.random.PRNGKey(2), (B3,), dtype=jnp.float32)
    out3 = jax.block_until_ready(timestep_embedding(t3, w1, b1, w2, b2))
    ref3 = reference(t3, w1, b1, w2, b2)
    assert out3.shape == (B3, DIM)
    assert jnp.allclose(out3, ref3, atol=1e-4, rtol=1e-4)

    print("KERNEL_OK")
</pallas_src>

<mosaic_0001>
module attributes {stable_mosaic.version = 11 : i64} {
  func.func @timestep_embedding_kernel(%arg0: i32, %arg1: memref<1x256xf32, #tpu.memory_space<vmem>>, %arg2: memref<1x256xf32, #tpu.memory_space<vmem>>, %arg3: memref<8x1xf32, #tpu.memory_space<vmem>>, %arg4: memref<256x128xf32, #tpu.memory_space<vmem>>, %arg5: memref<1x128xf32, #tpu.memory_space<vmem>>, %arg6: memref<128x128xf32, #tpu.memory_space<vmem>>, %arg7: memref<1x128xf32, #tpu.memory_space<vmem>>, %arg8: memref<8x128xf32, #tpu.memory_space<vmem>>) attributes {dimension_semantics = [#tpu.dimension_semantics<parallel>], iteration_bounds = array<i64: 1>, scalar_prefetch = 0 : i64, scratch_operands = 0 : i64, tpu.core_type = #tpu.core_type<tc>, window_params = [{pipeline_mode = #tpu.pipeline_mode<synchronous>, transform_indices = @transform_0, window_bounds = array<i64: 1, 256>}, {pipeline_mode = #tpu.pipeline_mode<synchronous>, transform_indices = @transform_1, window_bounds = array<i64: 1, 256>}, {transform_indices = @transform_2, window_bounds = array<i64: 8, 1>}, {pipeline_mode = #tpu.pipeline_mode<synchronous>, transform_indices = @transform_3, window_bounds = array<i64: 256, 128>}, {pipeline_mode = #tpu.pipeline_mode<synchronous>, transform_indices = @transform_4, window_bounds = array<i64: 1, 128>}, {pipeline_mode = #tpu.pipeline_mode<synchronous>, transform_indices = @transform_5, window_bounds = array<i64: 128, 128>}, {pipeline_mode = #tpu.pipeline_mode<synchronous>, transform_indices = @transform_6, window_bounds = array<i64: 1, 128>}, {transform_indices = @transform_7, window_bounds = array<i64: 8, 128>}]} {
    %c0 = arith.constant 0 : index
    %c0_0 = arith.constant 0 : index
    %0 = vector.load %arg3[%c0, %c0_0] : memref<8x1xf32, #tpu.memory_space<vmem>>, vector<8x1xf32>
    %c0_1 = arith.constant 0 : index
    %c0_2 = arith.constant 0 : index
    %1 = vector.load %arg1[%c0_1, %c0_2] : memref<1x256xf32, #tpu.memory_space<vmem>>, vector<1x256xf32>
    %2 = vector.broadcast %0 : vector<8x1xf32> to vector<8x256xf32>
    %3 = vector.broadcast %1 : vector<1x256xf32> to vector<8x256xf32>
    %4 = arith.mulf %2, %3 : vector<8x256xf32>
    %c0_3 = arith.constant 0 : index
    %c0_4 = arith.constant 0 : index
    %5 = vector.load %arg2[%c0_3, %c0_4] : memref<1x256xf32, #tpu.memory_space<vmem>>, vector<1x256xf32>
    %6 = vector.broadcast %5 : vector<1x256xf32> to vector<8x256xf32>
    %7 = arith.addf %4, %6 : vector<8x256xf32>
    %8 = math.sin %7 : vector<8x256xf32>
    %c0_5 = arith.constant 0 : index
    %c0_6 = arith.constant 0 : index
    %9 = vector.load %arg4[%c0_5, %c0_6] : memref<256x128xf32, #tpu.memory_space<vmem>>, vector<256x128xf32>
    %cst = arith.constant dense<0.000000e+00> : vector<8x128xf32>
    %10 = tpu.matmul %8, %9, %cst {dimension_numbers = #tpu.dot_dimension_numbers<[1], [0], [0], [1], [0, 0, 1, 1], [], []>} : vector<8x256xf32>, vector<256x128xf32>, vector<8x128xf32> -> vector<8x128xf32>
    %c0_7 = arith.constant 0 : index
    %c0_8 = arith.constant 0 : index
    %11 = vector.load %arg5[%c0_7, %c0_8] : memref<1x128xf32, #tpu.memory_space<vmem>>, vector<1x128xf32>
    %12 = vector.broadcast %11 : vector<1x128xf32> to vector<8x128xf32>
    %13 = arith.addf %10, %12 : vector<8x128xf32>
    %14 = arith.negf %13 : vector<8x128xf32>
    %15 = math.exp %14 : vector<8x128xf32>
    %cst_9 = arith.constant 1.000000e+00 : f32
    %16 = vector.broadcast %cst_9 : f32 to vector<8x128xf32>
    %17 = arith.addf %16, %15 : vector<8x128xf32>
    %18 = arith.divf %16, %17 : vector<8x128xf32>
    %19 = arith.mulf %13, %18 : vector<8x128xf32>
    %c0_10 = arith.constant 0 : index
    %c0_11 = arith.constant 0 : index
    %20 = vector.load %arg6[%c0_10, %c0_11] : memref<128x128xf32, #tpu.memory_space<vmem>>, vector<128x128xf32>
    %cst_12 = arith.constant dense<0.000000e+00> : vector<8x128xf32>
    %21 = tpu.matmul %19, %20, %cst_12 {dimension_numbers = #tpu.dot_dimension_numbers<[1], [0], [0], [1], [0, 0, 1, 1], [], []>} : vector<8x128xf32>, vector<128x128xf32>, vector<8x128xf32> -> vector<8x128xf32>
    %c0_13 = arith.constant 0 : index
    %c0_14 = arith.constant 0 : index
    %22 = vector.load %arg7[%c0_13, %c0_14] : memref<1x128xf32, #tpu.memory_space<vmem>>, vector<1x128xf32>
    %23 = vector.broadcast %22 : vector<1x128xf32> to vector<8x128xf32>
    %24 = arith.addf %21, %23 : vector<8x128xf32>
    %c0_15 = arith.constant 0 : index
    %c0_16 = arith.constant 0 : index
    %25 = vector.load %arg8[%c0_15, %c0_16] : memref<8x128xf32, #tpu.memory_space<vmem>>, vector<8x128xf32>
    tpu.vector_store %arg8[%c0_15, %c0_16], %24 {strides = array<i32>} : memref<8x128xf32, #tpu.memory_space<vmem>>, vector<8x128xf32>,
    return
  }
  func.func @transform_0(%arg0: i32) -> (i32, i32) {
    %c0_i32 = arith.constant 0 : i32
    %c0_i32_0 = arith.constant 0 : i32
    %c0_i32_1 = arith.constant 0 : i32
    return %c0_i32, %c0_i32_0 : i32, i32
  }
  func.func @transform_1(%arg0: i32) -> (i32, i32) {
    %c0_i32 = arith.constant 0 : i32
    %c0_i32_0 = arith.constant 0 : i32
    %c0_i32_1 = arith.constant 0 : i32
    return %c0_i32, %c0_i32_0 : i32, i32
  }
  func.func @transform_2(%arg0: i32) -> (i32, i32) {
    %c0_i32 = arith.constant 0 : i32
    %c0_i32_0 = arith.constant 0 : i32
    return %arg0, %c0_i32 : i32, i32
  }
  func.func @transform_3(%arg0: i32) -> (i32, i32) {
    %c0_i32 = arith.constant 0 : i32
    %c0_i32_0 = arith.constant 0 : i32
    %c0_i32_1 = arith.constant 0 : i32
    return %c0_i32, %c0_i32_0 : i32, i32
  }
  func.func @transform_4(%arg0: i32) -> (i32, i32) {
    %c0_i32 = arith.constant 0 : i32
    %c0_i32_0 = arith.constant 0 : i32
    %c0_i32_1 = arith.constant 0 : i32
    return %c0_i32, %c0_i32_0 : i32, i32
  }
  func.func @transform_5(%arg0: i32) -> (i32, i32) {
    %c0_i32 = arith.constant 0 : i32
    %c0_i32_0 = arith.constant 0 : i32
    %c0_i32_1 = arith.constant 0 : i32
    return %c0_i32, %c0_i32_0 : i32, i32
  }
  func.func @transform_6(%arg0: i32) -> (i32, i32) {
    %c0_i32 = arith.constant 0 : i32
    %c0_i32_0 = arith.constant 0 : i32
    %c0_i32_1 = arith.constant 0 : i32
    return %c0_i32, %c0_i32_0 : i32, i32
  }
  func.func @transform_7(%arg0: i32) -> (i32, i32) {
    %c0_i32 = arith.constant 0 : i32
    %c0_i32_0 = arith.constant 0 : i32
    return %arg0, %c0_i32 : i32, i32
  }
}

</mosaic_0001>

<llo_original>
// kernel: tpu_custom_call.1
$region0: #{tpu_custom_call.1}
  #allocation0 [shape = 'u32[]', space=smem, size = 0x4, offset = 0x4, fixed_abs, tag = 'smem constant byte address 0x4 - core index']
  #allocation1 [shape = 'u32[144,128]{1,0:T(1,128)}', space=vmem, size = 0x12000, scoped, tag = 'internal scratch']
  %s0 = inlined_call_operand.vmem [shape: f32[1,256], index: 0, kind: input, shape index: {}]
  %s1 = inlined_call_operand.vmem [shape: f32[1,256], index: 1, kind: input, shape index: {}]
  %s2 = inlined_call_operand.vmem [shape: f32[8,1], index: 2, kind: input, shape index: {}]
  %s3 = inlined_call_operand.hbm [shape: f32[256,128], index: 3, kind: input, shape index: {}]
  %s4 = inlined_call_operand.vmem [shape: f32[1,128], index: 4, kind: input, shape index: {}]
  %s5 = inlined_call_operand.hbm [shape: f32[128,128], index: 5, kind: input, shape index: {}]
  %s6 = inlined_call_operand.vmem [shape: f32[1,128], index: 6, kind: input, shape index: {}]
  %s7 = inlined_call_operand.hbm [shape: f32[8,128], index: 7, kind: output, shape index: {}]
  %s8 = sld [smem:[#allocation0]]
  $region46: #{tpu_custom_call.1} parent=0
    _
  %s10 = ssub.s32 1, %s8
  %s11 = scalar_select 0, %s10, %s8
  $region1: #{tpu_custom_call.1} parent=0
    #allocation2 [shape = 'u8[131072]{0}', space=vmem, size = 0x20000, scoped, tag = 'input window, operand 3, single buffered']
    #allocation3 [shape = 's32[1]{0}', space=sflag, size = 0x4, scoped, tag = 'scoped memory for tpu_custom_call.1']
    #allocation4 [shape = 's32[1]{0}', space=sflag, size = 0x4, scoped, tag = 'scoped memory for tpu_custom_call.1']
    #allocation5 [shape = 'u8[65536]{0}', space=vmem, size = 0x10000, scoped, tag = 'input window, operand 5, single buffered']
    #allocation6 [shape = 's32[1]{0}', space=sflag, size = 0x4, scoped, tag = 'scoped memory for tpu_custom_call.1']
    #allocation7 [shape = 'u8[4096]{0}', space=vmem, size = 0x1000, scoped, tag = 'output window, operand 0, single buffered']
    %12 = vsyncpa [#allocation3], 0
    %13 = vsyncpa [#allocation6], 0
    %14 = vsyncpa [#allocation4], 0
    // Predicated region
    $region2: #{tpu_custom_call.1} parent=1 // pred_check
      _
    $region3: #{tpu_custom_call.1} parent=1 // pred_check_branch
      %16 = sbr.rel (0) target = $region5
    $region4: #{tpu_custom_call.1} parent=1 // pred_region
      _
    $region5: #{tpu_custom_call.1} parent=1 // pred_fallthru
      _
    // Predicated region
    $region6: #{tpu_custom_call.1} parent=1 // pred_check
      _
    $region7: #{tpu_custom_call.1} parent=1 // pred_check_branch
      %18 = sbr.rel (0) target = $region9
    $region8: #{tpu_custom_call.1} parent=1 // pred_region
      _
    $region9: #{tpu_custom_call.1} parent=1 // pred_fallthru
      _
    // Predicated region
    $region10: #{tpu_custom_call.1} parent=1 // pred_check
      _
    $region11: #{tpu_custom_call.1} parent=1 // pred_check_branch
      %20 = sbr.rel (0) target = $region13
    $region12: #{tpu_custom_call.1} parent=1 // pred_region
      _
    $region13: #{tpu_custom_call.1} parent=1 // pred_fallthru
      _
    // Predicated region
    $region14: #{tpu_custom_call.1} parent=1 // pred_check
      _
    $region15: #{tpu_custom_call.1} parent=1 // pred_check_branch
      %22 = sbr.rel (0) target = $region17
    $region16: #{tpu_custom_call.1} parent=1 // pred_region
      %s24 = ssub.s32 4096, 4096
      %25 = vsyncadd [#allocation3], %s24
      %s26 = sshll.u32 [#allocation2], 4
      %s27 = int_to_ptr.vmem [resolvable:$true] %s26
      %32 = dma.hbm_to_vmem [thread:$0]  %s3, 4096, %s27, [#allocation3], 128, 128, 8
    $region17: #{tpu_custom_call.1} parent=1 // pred_fallthru
      _
    // Predicated region
    $region18: #{tpu_custom_call.1} parent=1 // pred_check
      _
    $region19: #{tpu_custom_call.1} parent=1 // pred_check_branch
      %34 = sbr.rel (0) target = $region21
    $region20: #{tpu_custom_call.1} parent=1 // pred_region
      _
    $region21: #{tpu_custom_call.1} parent=1 // pred_fallthru
      _
    // Predicated region
    $region22: #{tpu_custom_call.1} parent=1 // pred_check
      _
    $region23: #{tpu_custom_call.1} parent=1 // pred_check_branch
      %36 = sbr.rel (0) target = $region25
    $region24: #{tpu_custom_call.1} parent=1 // pred_region
      %s38 = ssub.s32 2048, 2048
      %39 = vsyncadd [#allocation6], %s38
      %s40 = sshll.u32 [#allocation5], 4
      %s41 = int_to_ptr.vmem [resolvable:$true] %s40
      %46 = dma.hbm_to_vmem [thread:$0]  %s5, 2048, %s41, [#allocation6], 128, 128, 8
    $region25: #{tpu_custom_call.1} parent=1 // pred_fallthru
      _
    // Predicated region
    $region26: #{tpu_custom_call.1} parent=1 // pred_check
      _
    $region27: #{tpu_custom_call.1} parent=1 // pred_check_branch
      %48 = sbr.rel (0) target = $region29
    $region28: #{tpu_custom_call.1} parent=1 // pred_region
      _
    $region29: #{tpu_custom_call.1} parent=1 // pred_fallthru
      _
    // Predicated region
    $region30: #{tpu_custom_call.1} parent=1 // pred_check
      _
    $region31: #{tpu_custom_call.1} parent=1 // pred_check_branch
      %50 = sbr.rel (0) target = $region33
    $region32: #{tpu_custom_call.1} parent=1 // pred_region
      %51 = dma.done [#allocation3], 4096
    $region33: #{tpu_custom_call.1} parent=1 // pred_fallthru
      _
    // Predicated region
    $region34: #{tpu_custom_call.1} parent=1 // pred_check
      _
    $region35: #{tpu_custom_call.1} parent=1 // pred_check_branch
      %53 = sbr.rel (0) target = $region37
    $region36: #{tpu_custom_call.1} parent=1 // pred_region
      %54 = dma.done [#allocation6], 2048
    $region37: #{tpu_custom_call.1} parent=1 // pred_fallthru
      _
    %v55 = vld [vmem:[%s2] sm:$0xff]
    %v56 = vld [vmem:[%s0] sm:$0x3]
    %58 = vset.pattern.permute.xlu0 0
    %59 = vperm.xlu0 %58, %v55
    %v60 = vpop.permute.xlu0 %59
    %v63 = vlaneseq
    %v64 = vshrl.u32 %v63, 7
    %v65 = vsub.s32 0, %v64
    %v66 = vrot.slane %v56, %v65
    %v67 = vlaneseq
    %v68 = vshrl.u32 %v67, 7
    %v69 = vsub.s32 1, %v68
    %v70 = vrot.slane %v56, %v69
    %v73 = vmul.f32 %v60, %v66
    %v74 = vmul.f32 %v60, %v70
    %v75 = vld [vmem:[%s1] sm:$0x3]
    %v77 = vlaneseq
    %v78 = vshrl.u32 %v77, 7
    %v79 = vsub.s32 0, %v78
    %v80 = vrot.slane %v75, %v79
    %v81 = vlaneseq
    %v82 = vshrl.u32 %v81, 7
    %v83 = vsub.s32 1, %v82
    %v84 = vrot.slane %v75, %v83
    %v87 = vadd.f32 %v73, %v80
    %v88 = vadd.f32 %v74, %v84
    %v89 = vand.u32 2147483647, %v87
    %vm90 = vcmp.le.f32.partialorder %v89, 0.7853982
    %vm91 = vcmp.lt.s32.totalorder %v87, 0
    %v92 = vand.u32 %v87, 2139095040
    %v93 = vshrl.u32 %v92, 23
    %v94 = vsub.s32 %v93, 127
    %v95 = vand.u32 2147483647, %v87
    %v96 = vand.u32 %v95, 8388607
    %v97 = vor.u32 %v96, 8388608
    %v98 = vsub.s32 0, %v97
    %v99 = vadd.s32 %v94, 1
    %vm100 = vcmp.gt.s32.totalorder %v99, 0
    %v101 = vsel %vm100, %v99, 0
    %v102 = vshrl.u32 %v101, 5
    %v103 = vand.u32 %v101, 31
    %v104 = vsub.s32 32, %v103
    %v105 = vshrl.u32 683565275, %v104
    %v106 = vshll.u32 683565275, %v103
    %v107 = vshrl.u32 2475754826, %v104
    %v108 = vor.u32 %v106, %v107
    %v109 = vshll.u32 2475754826, %v103
    %v110 = vshrl.u32 2131351028, %v104
    %v111 = vor.u32 %v109, %v110
    %v112 = vshll.u32 2131351028, %v103
    %v113 = vshrl.u32 2102212464, %v104
    %v114 = vor.u32 %v112, %v113
    %v115 = vshll.u32 2102212464, %v103
    %v116 = vshrl.u32 920167782, %v104
    %v117 = vor.u32 %v115, %v116
    %v118 = vshll.u32 920167782, %v103
    %v119 = vshrl.u32 1326507024, %v104
    %v120 = vor.u32 %v118, %v119
    %vm121 = vcmp.lt.s32.totalorder %v102, 1
    %vm122 = vcmp.lt.s32.totalorder %v102, 2
    %vm123 = vcmp.lt.s32.totalorder %v102, 3
    %vm124 = vcmp.lt.s32.totalorder %v102, 4
    %v125 = vsel %vm121, %v105, %v108
    %v126 = vsel %vm124, %v114, 2102212464
    %v127 = vsel %vm123, %v111, %v126
    %v128 = vsel %vm122, %v125, %v127
    %v129 = vsel %vm121, %v108, %v111
    %v130 = vsel %vm124, %v117, 920167782
    %v131 = vsel %vm123, %v114, %v130
    %v132 = vsel %vm122, %v129, %v131
    %v133 = vsel %vm121, %v111, %v114
    %v134 = vsel %vm124, %v120, 1326507024
    %v135 = vsel %vm123, %v117, %v134
    %v136 = vsel %vm122, %v133, %v135
    %v137 = vshll.u32 %v97, 8
    %v138 = vmul.u32.u64.compose %v137, %v136
    %v139 = vextract.low.u32 %v138
    %v140 = vextract.high.u32 %v138
    %v141 = vmul.u32.u64.compose %v137, %v132
    %v142 = vextract.low.u32 %v141
    %v143 = vextract.high.u32 %v141
    %v144 = vmul.u32 %v137, %v128
    %v145 = vadd.s32 %v140, %v142
    %vm146 = vc.u32 %v140, %v142
    %v147 = vadd.s32 %v143, 1
    %v148 = vsel %vm146, %v147, %v143
    %v149 = vadd.s32 %v144, %v148
    %v150 = vadd.s32 %v149, 536870912
    %v151 = vshrl.u32 %v150, 30
    %v152 = vshll.u32 %v151, 30
    %v153 = vsub.s32 %v149, %v152
    %vm154 = vcmp.lt.s32.totalorder %v153, 0
    %v155 = vsub.s32 0, %v153
    %v156 = vsel %vm154, %v155, %v153
    %v157 = vclz %v156
    %v158 = vsub.s32 %v157, 2
    %vm159 = vcmp.gt.s32.totalorder 0, %v158
    %v160 = vsel %vm159, 0, %v158
    %v161 = vsub.s32 32, %v160
    %v162 = vshll.u32 %v153, %v160
    %v163 = vshrl.u32 %v145, %v161
    %v164 = vor.u32 %v162, %v163
    %v165 = vsub.s32 4294967266, %v160
    %v166 = vadd.s32 %v165, 127
    %v167 = vshll.u32 %v166, 23
    %v168 = vor.u32 4788187, %v167
    %v169 = vand.u32 2147483647, %v168
    %v171 = vcvt.s32.f32 %v164
    %v172 = vmul.f32 %v171, %v169
    %v173 = vxor.u32 %v172, 2147483648
    %v174 = vsel %vm91, %v173, %v172
    %v175 = vsub.s32 4, %v151
    %v176 = vsel %vm91, %v175, %v151
    %v177 = vsel %vm90, %v87, %v174
    %v178 = vsel %vm90, 0, %v176
    %v179 = vcosq.f32.pop %v177
    %v180 = vsinq.f32.pop %v177
    %vm181 = vweird.f32 %v87
    %v182 = vadd.s32 %v178, 3
    %v183 = vand.u32 %v182, 3
    %vm184 = vcmp.lt.s32.totalorder %v183, 2
    %vm185 = vcmp.eq.s32.totalorder %v183, 0
    %v186 = vxor.u32 %v180, 2147483648
    %v187 = vsel %vm185, %v179, %v186
    %vm188 = vcmp.eq.s32.totalorder %v183, 2
    %v189 = vxor.u32 %v179, 2147483648
    %v190 = vsel %vm188, %v189, %v180
    %v191 = vsel %vm184, %v187, %v190
    %v192 = vsel %vm181, nan, %v191
    %v193 = vand.u32 2147483647, %v88
    %vm194 = vcmp.le.f32.partialorder %v193, 0.7853982
    %vm195 = vcmp.lt.s32.totalorder %v88, 0
    %v196 = vand.u32 %v88, 2139095040
    %v197 = vshrl.u32 %v196, 23
    %v198 = vsub.s32 %v197, 127
    %v199 = vand.u32 2147483647, %v88
    %v200 = vand.u32 %v199, 8388607
    %v201 = vor.u32 %v200, 8388608
    %v202 = vsub.s32 0, %v201
    %v203 = vadd.s32 %v198, 1
    %vm204 = vcmp.gt.s32.totalorder %v203, 0
    %v205 = vsel %vm204, %v203, 0
    %v206 = vshrl.u32 %v205, 5
    %v207 = vand.u32 %v205, 31
    %v208 = vsub.s32 32, %v207
    %v209 = vshrl.u32 683565275, %v208
    %v210 = vshll.u32 683565275, %v207
    %v211 = vshrl.u32 2475754826, %v208
    %v212 = vor.u32 %v210, %v211
    %v213 = vshll.u32 2475754826, %v207
    %v214 = vshrl.u32 2131351028, %v208
    %v215 = vor.u32 %v213, %v214
    %v216 = vshll.u32 2131351028, %v207
    %v217 = vshrl.u32 2102212464, %v208
    %v218 = vor.u32 %v216, %v217
    %v219 = vshll.u32 2102212464, %v207
    %v220 = vshrl.u32 920167782, %v208
    %v221 = vor.u32 %v219, %v220
    %v222 = vshll.u32 920167782, %v207
    %v223 = vshrl.u32 1326507024, %v208
    %v224 = vor.u32 %v222, %v223
    %vm225 = vcmp.lt.s32.totalorder %v206, 1
    %vm226 = vcmp.lt.s32.totalorder %v206, 2
    %vm227 = vcmp.lt.s32.totalorder %v206, 3
    %vm228 = vcmp.lt.s32.totalorder %v206, 4
    %v229 = vsel %vm225, %v209, %v212
    %v230 = vsel %vm228, %v218, 2102212464
    %v231 = vsel %vm227, %v215, %v230
    %v232 = vsel %vm226, %v229, %v231
    %v233 = vsel %vm225, %v212, %v215
    %v234 = vsel %vm228, %v221, 920167782
    %v235 = vsel %vm227, %v218, %v234
    %v236 = vsel %vm226, %v233, %v235
    %v237 = vsel %vm225, %v215, %v218
    %v238 = vsel %vm228, %v224, 1326507024
    %v239 = vsel %vm227, %v221, %v238
    %v240 = vsel %vm226, %v237, %v239
    %v241 = vshll.u32 %v201, 8
    %v242 = vmul.u32.u64.compose %v241, %v240
    %v243 = vextract.low.u32 %v242
    %v244 = vextract.high.u32 %v242
    %v245 = vmul.u32.u64.compose %v241, %v236
    %v246 = vextract.low.u32 %v245
    %v247 = vextract.high.u32 %v245
    %v248 = vmul.u32 %v241, %v232
    %v249 = vadd.s32 %v244, %v246
    %vm250 = vc.u32 %v244, %v246
    %v251 = vadd.s32 %v247, 1
    %v252 = vsel %vm250, %v251, %v247
    %v253 = vadd.s32 %v248, %v252
    %v254 = vadd.s32 %v253, 536870912
    %v255 = vshrl.u32 %v254, 30
    %v256 = vshll.u32 %v255, 30
    %v257 = vsub.s32 %v253, %v256
    %vm258 = vcmp.lt.s32.totalorder %v257, 0
    %v259 = vsub.s32 0, %v257
    %v260 = vsel %vm258, %v259, %v257
    %v261 = vclz %v260
    %v262 = vsub.s32 %v261, 2
    %vm263 = vcmp.gt.s32.totalorder 0, %v262
    %v264 = vsel %vm263, 0, %v262
    %v265 = vsub.s32 32, %v264
    %v266 = vshll.u32 %v257, %v264
    %v267 = vshrl.u32 %v249, %v265
    %v268 = vor.u32 %v266, %v267
    %v269 = vsub.s32 4294967266, %v264
    %v270 = vadd.s32 %v269, 127
    %v271 = vshll.u32 %v270, 23
    %v272 = vor.u32 4788187, %v271
    %v273 = vand.u32 2147483647, %v272
    %v275 = vcvt.s32.f32 %v268
    %v276 = vmul.f32 %v275, %v273
    %v277 = vxor.u32 %v276, 2147483648
    %v278 = vsel %vm195, %v277, %v276
    %v279 = vsub.s32 4, %v255
    %v280 = vsel %vm195, %v279, %v255
    %v281 = vsel %vm194, %v88, %v278
    %v282 = vsel %vm194, 0, %v280
    %v283 = vcosq.f32.pop %v281
    %v284 = vsinq.f32.pop %v281
    %vm285 = vweird.f32 %v88
    %v286 = vadd.s32 %v282, 3
    %v287 = vand.u32 %v286, 3
    %vm288 = vcmp.lt.s32.totalorder %v287, 2
    %vm289 = vcmp.eq.s32.totalorder %v287, 0
    %v290 = vxor.u32 %v284, 2147483648
    %v291 = vsel %vm289, %v283, %v290
    %vm292 = vcmp.eq.s32.totalorder %v287, 2
    %v293 = vxor.u32 %v283, 2147483648
    %v294 = vsel %vm292, %v293, %v284
    %v295 = vsel %vm288, %v291, %v294
    %v296 = vsel %vm285, nan, %v295
    %v297 = vld [vmem:[#allocation2] sm:$0xff]
    %v298 = vld [vmem:[#allocation2 + $0x8] sm:$0xff]
    %v299 = vld [vmem:[#allocation2 + $0x10] sm:$0xff]
    %v300 = vld [vmem:[#allocation2 + $0x18] sm:$0xff]
    %v301 = vld [vmem:[#allocation2 + $0x20] sm:$0xff]
    %v302 = vld [vmem:[#allocation2 + $0x28] sm:$0xff]
    %v303 = vld [vmem:[#allocation2 + $0x30] sm:$0xff]
    %v304 = vld [vmem:[#allocation2 + $0x38] sm:$0xff]
    %v305 = vld [vmem:[#allocation2 + $0x40] sm:$0xff]
    %v306 = vld [vmem:[#allocation2 + $0x48] sm:$0xff]
    %v307 = vld [vmem:[#allocation2 + $0x50] sm:$0xff]
    %v308 = vld [vmem:[#allocation2 + $0x58] sm:$0xff]
    %v309 = vld [vmem:[#allocation2 + $0x60] sm:$0xff]
    %v310 = vld [vmem:[#allocation2 + $0x68] sm:$0xff]
    %v311 = vld [vmem:[#allocation2 + $0x70] sm:$0xff]
    %v312 = vld [vmem:[#allocation2 + $0x78] sm:$0xff]
    %v313 = vld [vmem:[#allocation2 + $0x80] sm:$0xff]
    %v314 = vld [vmem:[#allocation2 + $0x88] sm:$0xff]
    %v315 = vld [vmem:[#allocation2 + $0x90] sm:$0xff]
    %v316 = vld [vmem:[#allocation2 + $0x98] sm:$0xff]
    %v317 = vld [vmem:[#allocation2 + $0xa0] sm:$0xff]
    %v318 = vld [vmem:[#allocation2 + $0xa8] sm:$0xff]
    %v319 = vld [vmem:[#allocation2 + $0xb0] sm:$0xff]
    %v320 = vld [vmem:[#allocation2 + $0xb8] sm:$0xff]
    %v321 = vld [vmem:[#allocation2 + $0xc0] sm:$0xff]
    %v322 = vld [vmem:[#allocation2 + $0xc8] sm:$0xff]
    %v323 = vld [vmem:[#allocation2 + $0xd0] sm:$0xff]
    %v324 = vld [vmem:[#allocation2 + $0xd8] sm:$0xff]
    %v325 = vld [vmem:[#allocation2 + $0xe0] sm:$0xff]
    %v326 = vld [vmem:[#allocation2 + $0xe8] sm:$0xff]
    %v327 = vld [vmem:[#allocation2 + $0xf0] sm:$0xff]
    %v328 = vld [vmem:[#allocation2 + $0xf8] sm:$0xff]
    %v329 = vld [vmem:[%s4] sm:$0x1]
    %v331 = vlaneseq
    %v332 = vshrl.u32 %v331, 7
    %v333 = vsub.s32 0, %v332
    %v334 = vrot.slane %v329, %v333
    %336 = vmatprep.subr.mxu0 0.0
    %337 = vmatpush1.msra.mxu0 %v297
    %338 = vmatprep.subr.mxu0 0.0
    %339 = vmatpush1.msra.mxu0 %v298
    %340 = vmatprep.subr.mxu0 0.0
    %341 = vmatpush1.msra.mxu0 %v299
    %342 = vmatprep.subr.mxu0 0.0
    %343 = vmatpush1.msra.mxu0 %v300
    %344 = vmatprep.subr.mxu0 0.0
    %345 = vmatpush1.msra.mxu0 %v301
    %346 = vmatprep.subr.mxu0 0.0
    %347 = vmatpush1.msra.mxu0 %v302
    %348 = vmatprep.subr.mxu0 0.0
    %349 = vmatpush1.msra.mxu0 %v303
    %350 = vmatprep.subr.mxu0 0.0
    %351 = vmatpush1.msra.mxu0 %v304
    %352 = vmatprep.subr.mxu0 0.0
    %353 = vmatpush1.msra.mxu0 %v305
    %354 = vmatprep.subr.mxu0 0.0
    %355 = vmatpush1.msra.mxu0 %v306
    %356 = vmatprep.subr.mxu0 0.0
    %357 = vmatpush1.msra.mxu0 %v307
    %358 = vmatprep.subr.mxu0 0.0
    %359 = vmatpush1.msra.mxu0 %v308
    %360 = vmatprep.subr.mxu0 0.0
    %361 = vmatpush1.msra.mxu0 %v309
    %362 = vmatprep.subr.mxu0 0.0
    %363 = vmatpush1.msra.mxu0 %v310
    %364 = vmatprep.subr.mxu0 0.0
    %365 = vmatpush1.msra.mxu0 %v311
    %366 = vmatprep.subr.mxu0 0.0
    %367 = vmatpush1.msra.mxu0 %v312
    %368 = vmatprep.subr.mxu0 0.0
    %369 = vmatpush1.msra.mxu0 %v313
    %370 = vmatprep.subr.mxu0 0.0
    %371 = vmatpush1.msra.mxu0 %v314
    %372 = vmatprep.subr.mxu0 0.0
    %373 = vmatpush1.msra.mxu0 %v315
    %374 = vmatprep.subr.mxu0 0.0
    %375 = vmatpush1.msra.mxu0 %v316
    %376 = vmatprep.subr.mxu0 0.0
    %377 = vmatpush1.msra.mxu0 %v317
    %378 = vmatprep.subr.mxu0 0.0
    %379 = vmatpush1.msra.mxu0 %v318
    %380 = vmatprep.subr.mxu0 0.0
    %381 = vmatpush1.msra.mxu0 %v319
    %382 = vmatprep.subr.mxu0 0.0
    %383 = vmatpush1.msra.mxu0 %v320
    %384 = vmatprep.subr.mxu0 0.0
    %385 = vmatpush1.msra.mxu0 %v321
    %386 = vmatprep.subr.mxu0 0.0
    %387 = vmatpush1.msra.mxu0 %v322
    %388 = vmatprep.subr.mxu0 0.0
    %389 = vmatpush1.msra.mxu0 %v323
    %390 = vmatprep.subr.mxu0 0.0
    %391 = vmatpush1.msra.mxu0 %v324
    %392 = vmatprep.subr.mxu0 0.0
    %393 = vmatpush1.msra.mxu0 %v325
    %394 = vmatprep.subr.mxu0 0.0
    %395 = vmatpush1.msra.mxu0 %v326
    %396 = vmatprep.subr.mxu0 0.0
    %397 = vmatpush1.msra.mxu0 %v327
    %398 = vmatprep.subr.mxu0 0.0
    %399 = vmatpush1.msra.mxu0 %v328
    %400 = vmatprep.mubr.f32.mxu0 %v296
    %401 = vmatmul.mubr.f32.gmra.mrb[0].mxu0 %v192
    %v402 = vpop.f32.mrb[0].mxu0
    %v403 = vadd.f32 %v334, %v402
    %v404 = vpop.f32.mrb[0].mxu0
    %405 = vdwg.mxu0
    %v406 = vxor.u32 %v403, 2147483648
    %v407 = vmul.f32 %v406, 1.442695
    %v408 = vpow.pop %v407
    %v409 = vadd.f32 %v408, 1.0
    %v410 = vrcp.pop %v409
    %v411 = vmul.f32 1.0, %v410
    %v412 = vmul.f32 %v403, %v411
    %v413 = vld [vmem:[#allocation5] sm:$0xff]
    %v414 = vld [vmem:[#allocation5 + $0x8] sm:$0xff]
    %v415 = vld [vmem:[#allocation5 + $0x10] sm:$0xff]
    %v416 = vld [vmem:[#allocation5 + $0x18] sm:$0xff]
    %v417 = vld [vmem:[#allocation5 + $0x20] sm:$0xff]
    %v418 = vld [vmem:[#allocation5 + $0x28] sm:$0xff]
    %v419 = vld [vmem:[#allocation5 + $0x30] sm:$0xff]
    %v420 = vld [vmem:[#allocation5 + $0x38] sm:$0xff]
    %v421 = vld [vmem:[#allocation5 + $0x40] sm:$0xff]
    %v422 = vld [vmem:[#allocation5 + $0x48] sm:$0xff]
    %v423 = vld [vmem:[#allocation5 + $0x50] sm:$0xff]
    %v424 = vld [vmem:[#allocation5 + $0x58] sm:$0xff]
    %v425 = vld [vmem:[#allocation5 + $0x60] sm:$0xff]
    %v426 = vld [vmem:[#allocation5 + $0x68] sm:$0xff]
    %v427 = vld [vmem:[#allocation5 + $0x70] sm:$0xff]
    %v428 = vld [vmem:[#allocation5 + $0x78] sm:$0xff]
    %v429 = vld [vmem:[%s6] sm:$0x1]
    %v431 = vlaneseq
    %v432 = vshrl.u32 %v431, 7
    %v433 = vsub.s32 0, %v432
    %v434 = vrot.slane %v429, %v433
    %436 = vmatprep.subr.mxu0 0.0
    %437 = vmatpush1.msra.mxu0 %v413
    %438 = vmatprep.subr.mxu0 0.0
    %439 = vmatpush1.msra.mxu0 %v414
    %440 = vmatprep.subr.mxu0 0.0
    %441 = vmatpush1.msra.mxu0 %v415
    %442 = vmatprep.subr.mxu0 0.0
    %443 = vmatpush1.msra.mxu0 %v416
    %444 = vmatprep.subr.mxu0 0.0
    %445 = vmatpush1.msra.mxu0 %v417
    %446 = vmatprep.subr.mxu0 0.0
    %447 = vmatpush1.msra.mxu0 %v418
    %448 = vmatprep.subr.mxu0 0.0
    %449 = vmatpush1.msra.mxu0 %v419
    %450 = vmatprep.subr.mxu0 0.0
    %451 = vmatpush1.msra.mxu0 %v420
    %452 = vmatprep.subr.mxu0 0.0
    %453 = vmatpush1.msra.mxu0 %v421
    %454 = vmatprep.subr.mxu0 0.0
    %455 = vmatpush1.msra.mxu0 %v422
    %456 = vmatprep.subr.mxu0 0.0
    %457 = vmatpush1.msra.mxu0 %v423
    %458 = vmatprep.subr.mxu0 0.0
    %459 = vmatpush1.msra.mxu0 %v424
    %460 = vmatprep.subr.mxu0 0.0
    %461 = vmatpush1.msra.mxu0 %v425
    %462 = vmatprep.subr.mxu0 0.0
    %463 = vmatpush1.msra.mxu0 %v426
    %464 = vmatprep.subr.mxu0 0.0
    %465 = vmatpush1.msra.mxu0 %v427
    %466 = vmatprep.subr.mxu0 0.0
    %467 = vmatpush1.msra.mxu0 %v428
    %468 = vmatprep.subr.mxu0 0.0
    %469 = vmatpush1.msra.mxu0 0.0
    %470 = vmatprep.subr.mxu0 0.0
    %471 = vmatpush1.msra.mxu0 0.0
    %472 = vmatprep.subr.mxu0 0.0
    %473 = vmatpush1.msra.mxu0 0.0
    %474 = vmatprep.subr.mxu0 0.0
    %475 = vmatpush1.msra.mxu0 0.0
    %476 = vmatprep.subr.mxu0 0.0
    %477 = vmatpush1.msra.mxu0 0.0
    %478 = vmatprep.subr.mxu0 0.0
    %479 = vmatpush1.msra.mxu0 0.0
    %480 = vmatprep.subr.mxu0 0.0
    %481 = vmatpush1.msra.mxu0 0.0
    %482 = vmatprep.subr.mxu0 0.0
    %483 = vmatpush1.msra.mxu0 0.0
    %484 = vmatprep.subr.mxu0 0.0
    %485 = vmatpush1.msra.mxu0 0.0
    %486 = vmatprep.subr.mxu0 0.0
    %487 = vmatpush1.msra.mxu0 0.0
    %488 = vmatprep.subr.mxu0 0.0
    %489 = vmatpush1.msra.mxu0 0.0
    %490 = vmatprep.subr.mxu0 0.0
    %491 = vmatpush1.msra.mxu0 0.0
    %492 = vmatprep.subr.mxu0 0.0
    %493 = vmatpush1.msra.mxu0 0.0
    %494 = vmatprep.subr.mxu0 0.0
    %495 = vmatpush1.msra.mxu0 0.0
    %496 = vmatprep.subr.mxu0 0.0
    %497 = vmatpush1.msra.mxu0 0.0
    %498 = vmatprep.subr.mxu0 0.0
    %499 = vmatpush1.msra.mxu0 0.0
    %500 = vmatprep.mubr.f32.mxu0 0.0
    %501 = vmatmul.mubr.f32.gmra.mrb[0].mxu0 %v412
    %v502 = vpop.f32.mrb[0].mxu0
    %v503 = vadd.f32 %v434, %v502
    %v504 = vpop.f32.mrb[0].mxu0
    %505 = vdwg.mxu0
    %506 = vst [vmem:[#allocation7] sm:$0xff] %v503
    // Predicated region
    $region38: #{tpu_custom_call.1} parent=1 // pred_check
      _
    $region39: #{tpu_custom_call.1} parent=1 // pred_check_branch
      %508 = sbr.rel (0) target = $region41
    $region40: #{tpu_custom_call.1} parent=1 // pred_region
      %s510 = ssub.s32 128, 128
      %511 = vsyncadd [#allocation4], %s510
      %s513 = sshll.u32 [#allocation7], 4
      %s514 = int_to_ptr.vmem [resolvable:$true] %s513
      %516 = dma.vmem_to_hbm [thread:$0]  %s514, 128, %s7, [#allocation4]
    $region41: #{tpu_custom_call.1} parent=1 // pred_fallthru
      _
    // Predicated region
    $region42: #{tpu_custom_call.1} parent=1 // pred_check
      _
    $region43: #{tpu_custom_call.1} parent=1 // pred_check_branch
      %518 = sbr.rel (0) target = $region45
    $region44: #{tpu_custom_call.1} parent=1 // pred_region
      %519 = dma.done [#allocation4], 128
    $region45: #{tpu_custom_call.1} parent=1 // pred_fallthru
      _
    %520 = vsyncpa [#allocation3], 1
    %521 = vsyncpa [#allocation6], 1
    %522 = vsyncpa [#allocation4], 1

</llo_original>
